<compile_context>
chip_gen: v7x
topology: tpu7x:2x2x1
jax: 0.10.0
libtpu: 0.0.40
codegen_flags: <defaults>
</compile_context>

<pallas_src>
import functools

import jax
import jax.numpy as jnp
import numpy as np
from jax.experimental import pallas as pl
from jax.experimental.pallas import tpu as pltpu


def _focal_loss_kernel(logits_ref, targets_ref, alpha_ref, loss_ref, *,
                       gamma, n_valid, need_mask):
    """Processes one (C, block_n) column tile of the (transposed) batch."""
    x = logits_ref[...].astype(jnp.float32)        # (C, bn)  upcast in-register
    t = targets_ref[...]                           # (1, bn)  int32
    alpha = alpha_ref[...].astype(jnp.float32)     # (C, 1)

    c, bn = x.shape
    class_ids = jax.lax.broadcasted_iota(jnp.int32, (c, bn), 0)
    onehot = (class_ids == t).astype(jnp.float32)  # (C, bn)

    # numerically stable log-softmax of the target class (per column / sample)
    m = jnp.max(x, axis=0, keepdims=True)          # (1, bn)   sublane reduce
    z = x - m
    denom = jnp.sum(jnp.exp(z), axis=0, keepdims=True)
    z_t = jnp.sum(z * onehot, axis=0, keepdims=True)
    log_p = z_t - jnp.log(denom)                   # log p_t   (1, bn)
    p_t = jnp.exp(log_p)

    alpha_t = jnp.sum(alpha * onehot, axis=0, keepdims=True)   # (1, bn)

    one_minus = 1.0 - p_t
    if float(gamma) == int(gamma) and gamma >= 0:
        # integer gamma (default 2): repeated multiply, no pow lowering needed
        w = jnp.ones_like(p_t)
        for _ in range(int(gamma)):
            w = w * one_minus
    else:
        w = jnp.power(one_minus, float(gamma))

    loss_i = -alpha_t * w * log_p                  # (1, bn)

    if need_mask:  # only emitted (compile-time) when the last tile is partial
        col = pl.program_id(0) * bn + jax.lax.broadcasted_iota(
            jnp.int32, (1, bn), 1)
        loss_i = jnp.where(col < n_valid, loss_i, 0.0)

    loss_ref[...] = loss_i                         # lane-dense store


def focal_loss(logits, targets, alpha=None, gamma=2, size_average=True,
               block_n=None):
    """Focal loss matching the PyTorch reference module (forward)."""
    N, C = logits.shape
    itemsize = jnp.dtype(logits.dtype).itemsize

    # Lane-dense layout: batch on lanes (last dim), classes on sublanes.
    logits_t = jnp.transpose(logits)                        # (C, N), native dtype
    targets_row = targets.reshape(1, N).astype(jnp.int32)   # (1, N)

    if alpha is None:
        alpha_col = jnp.ones((C, 1), jnp.float32)
    else:
        alpha_col = jnp.asarray(alpha, jnp.float32).reshape(C, 1)

    # Tile sizing: ~2 MiB of logits per grid step, 128-lane aligned; a single
    # full-extent block when the whole batch already fits in one tile.
    if block_n is None:
        target_bytes = 2 * 1024 * 1024
        block_n = max(128, (target_bytes // max(1, C * itemsize)) // 128 * 128)
    else:
        block_n = max(128, ((block_n + 127) // 128) * 128)
    if block_n >= N:
        block_n = N                                          # single block
    num_blocks = int(pl.cdiv(N, block_n))
    padded_n = num_blocks * block_n
    need_mask = padded_n != N

    kernel = functools.partial(_focal_loss_kernel, gamma=gamma, n_valid=N,
                               need_mask=need_mask)

    logits_spec = pl.BlockSpec((C, block_n), lambda i: (0, i))
    if num_blocks >= 3:
        # short per-step compute: 3-deep buffering hides exposed DMA latency
        logits_spec = pl.BlockSpec((C, block_n), lambda i: (0, i),
                                   pipeline_mode=pl.Buffered(3))

    per_sample = pl.pallas_call(
        kernel,
        grid=(num_blocks,),
        in_specs=[
            logits_spec,                                     # (C, bn), native dtype
            pl.BlockSpec((1, block_n), lambda i: (0, i)),    # targets tile
            pl.BlockSpec((C, 1), lambda i: (0, 0)),          # alpha (resident)
        ],
        out_specs=pl.BlockSpec((1, block_n), lambda i: (0, i)),
        out_shape=jax.ShapeDtypeStruct((1, padded_n), jnp.float32),
        compiler_params=pltpu.CompilerParams(
            dimension_semantics=("parallel",),               # megacore-friendly
            vmem_limit_bytes=48 * 1024 * 1024),
    )(logits_t, targets_row, alpha_col)

    total = jnp.sum(per_sample)            # tiny final reduce (padded rows are 0)
    if size_average:
        return total / float(N)
    return total


def _focal_loss_reference(logits, targets, alpha, gamma, size_average):
    # pure-JAX reference mirroring the PyTorch module
    p = jax.nn.softmax(logits.astype(jnp.float32), axis=1)
    p_t = jnp.take_along_axis(p, targets[:, None], axis=1)[:, 0]
    a_t = jnp.asarray(alpha, jnp.float32).reshape(-1)[targets]
    log_p = jnp.log(p_t)
    loss = -a_t * (1.0 - p_t) ** gamma * log_p
    return loss.mean() if size_average else loss.sum()


if __name__ == "__main__":
    key = jax.random.PRNGKey(0)
    k1, k2, k3, k4 = jax.random.split(key, 4)

    # ---- Case 1: f32 logits, single full-extent block, mean reduction ------
    N, C = 256, 16
    logits = 2.0 * jax.random.normal(k1, (N, C), jnp.float32)
    targets = jax.random.randint(k2, (N,), 0, C, jnp.int32)

    loss_fn = jax.jit(functools.partial(focal_loss, gamma=2, size_average=True))
    loss = jax.block_until_ready(loss_fn(logits, targets))
    ref = _focal_loss_reference(logits, targets, jnp.ones((C,)), 2, True)
    assert loss.shape == (), loss.shape
    assert bool(jnp.isfinite(loss))
    assert np.allclose(np.asarray(loss), np.asarray(ref),
                       rtol=1e-5, atol=1e-6), (float(loss), float(ref))

    # ---- Case 2: multi-block grid, partial last tile, per-class alpha, sum --
    N2, C2 = 300, 10
    logits2 = 1.5 * jax.random.normal(k3, (N2, C2), jnp.float32)
    targets2 = jax.random.randint(k4, (N2,), 0, C2, jnp.int32)
    alpha2 = jnp.linspace(0.5, 1.5, C2, dtype=jnp.float32)

    loss2 = jax.block_until_ready(
        focal_loss(logits2, targets2, alpha=alpha2, gamma=2,
                   size_average=False, block_n=128))
    ref2 = _focal_loss_reference(logits2, targets2, alpha2, 2, False)
    assert np.allclose(np.asarray(loss2), np.asarray(ref2),
                       rtol=1e-5, atol=1e-5), (float(loss2), float(ref2))

    # ---- Case 3: bf16 logits DMA'd natively (upcast happens in-kernel) ------
    logits_bf = logits.astype(jnp.bfloat16)
    loss3 = jax.block_until_ready(focal_loss(logits_bf, targets, gamma=2,
                                             size_average=True))
    ref3 = _focal_loss_reference(logits_bf.astype(jnp.float32), targets,
                                 jnp.ones((C,)), 2, True)
    assert np.allclose(np.asarray(loss3), np.asarray(ref3),
                       rtol=1e-4, atol=1e-5), (float(loss3), float(ref3))

    print("KERNEL_OK")
</pallas_src>

<mosaic_0001>
module attributes {stable_mosaic.version = 11 : i64} {
  func.func @_focal_loss_kernel(%arg0: i32, %arg1: memref<16x256xf32, #tpu.memory_space<vmem>>, %arg2: memref<1x256xi32, #tpu.memory_space<vmem>>, %arg3: memref<16x1xf32, #tpu.memory_space<vmem>>, %arg4: memref<1x256xf32, #tpu.memory_space<vmem>>) attributes {dimension_semantics = [#tpu.dimension_semantics<parallel>], iteration_bounds = array<i64: 1>, scalar_prefetch = 0 : i64, scratch_operands = 0 : i64, tpu.core_type = #tpu.core_type<tc>, window_params = [{transform_indices = @transform_0, window_bounds = array<i64: 16, 256>}, {transform_indices = @transform_1, window_bounds = array<i64: 1, 256>}, {pipeline_mode = #tpu.pipeline_mode<synchronous>, transform_indices = @transform_2, window_bounds = array<i64: 16, 1>}, {transform_indices = @transform_3, window_bounds = array<i64: 1, 256>}]} {
    %c0 = arith.constant 0 : index
    %c0_0 = arith.constant 0 : index
    %0 = vector.load %arg1[%c0, %c0_0] : memref<16x256xf32, #tpu.memory_space<vmem>>, vector<16x256xf32>
    %c0_1 = arith.constant 0 : index
    %c0_2 = arith.constant 0 : index
    %1 = vector.load %arg2[%c0_1, %c0_2] : memref<1x256xi32, #tpu.memory_space<vmem>>, vector<1x256xi32>
    %c0_3 = arith.constant 0 : index
    %c0_4 = arith.constant 0 : index
    %2 = vector.load %arg3[%c0_3, %c0_4] : memref<16x1xf32, #tpu.memory_space<vmem>>, vector<16x1xf32>
    %3 = tpu.iota {dimensions = array<i32: 0>} : vector<16x256xi32>
    %4 = vector.broadcast %1 : vector<1x256xi32> to vector<16x256xi32>
    %5 = arith.cmpi eq, %3, %4 : vector<16x256xi32>
    %6 = arith.extui %5 : vector<16x256xi1> to vector<16x256xi32>
    %7 = arith.sitofp %6 : vector<16x256xi32> to vector<16x256xf32>
    %cst = arith.constant dense<0xFF800000> : vector<256xf32>
    %8 = vector.multi_reduction <maximumf>, %0, %cst [0] : vector<16x256xf32> to vector<256xf32>
    %9 = vector.shape_cast %8 : vector<256xf32> to vector<1x256xf32>
    %10 = vector.broadcast %9 : vector<1x256xf32> to vector<16x256xf32>
    %11 = arith.subf %0, %10 : vector<16x256xf32>
    %12 = math.exp %11 : vector<16x256xf32>
    %cst_5 = arith.constant dense<0.000000e+00> : vector<256xf32>
    %13 = vector.multi_reduction <add>, %12, %cst_5 [0] : vector<16x256xf32> to vector<256xf32>
    %14 = vector.shape_cast %13 : vector<256xf32> to vector<1x256xf32>
    %15 = arith.mulf %11, %7 : vector<16x256xf32>
    %cst_6 = arith.constant dense<0.000000e+00> : vector<256xf32>
    %16 = vector.multi_reduction <add>, %15, %cst_6 [0] : vector<16x256xf32> to vector<256xf32>
    %17 = vector.shape_cast %16 : vector<256xf32> to vector<1x256xf32>
    %18 = math.log %14 : vector<1x256xf32>
    %19 = arith.subf %17, %18 : vector<1x256xf32>
    %20 = math.exp %19 : vector<1x256xf32>
    %21 = vector.broadcast %2 : vector<16x1xf32> to vector<16x256xf32>
    %22 = arith.mulf %21, %7 : vector<16x256xf32>
    %cst_7 = arith.constant dense<0.000000e+00> : vector<256xf32>
    %23 = vector.multi_reduction <add>, %22, %cst_7 [0] : vector<16x256xf32> to vector<256xf32>
    %24 = vector.shape_cast %23 : vector<256xf32> to vector<1x256xf32>
    %cst_8 = arith.constant 1.000000e+00 : f32
    %25 = vector.broadcast %cst_8 : f32 to vector<1x256xf32>
    %26 = arith.subf %25, %20 : vector<1x256xf32>
    %cst_9 = arith.constant 1.000000e+00 : f32
    %27 = vector.broadcast %cst_9 : f32 to vector<1x256xf32>
    %28 = arith.mulf %27, %26 : vector<1x256xf32>
    %29 = arith.mulf %28, %26 : vector<1x256xf32>
    %cst_10 = arith.constant 0.000000e+00 : f32
    %30 = vector.broadcast %cst_10 : f32 to vector<1x256xf32>
    %31 = arith.subf %30, %24 : vector<1x256xf32>
    %32 = arith.mulf %31, %29 : vector<1x256xf32>
    %33 = arith.mulf %32, %19 : vector<1x256xf32>
    %c0_11 = arith.constant 0 : index
    %c0_12 = arith.constant 0 : index
    %34 = vector.load %arg4[%c0_11, %c0_12] : memref<1x256xf32, #tpu.memory_space<vmem>>, vector<1x256xf32>
    tpu.vector_store %arg4[%c0_11, %c0_12], %33 {strides = array<i32>} : memref<1x256xf32, #tpu.memory_space<vmem>>, vector<1x256xf32>,
    return
  }
  func.func @transform_0(%arg0: i32) -> (i32, i32) {
    %c0_i32 = arith.constant 0 : i32
    %c0_i32_0 = arith.constant 0 : i32
    return %c0_i32, %arg0 : i32, i32
  }
  func.func @transform_1(%arg0: i32) -> (i32, i32) {
    %c0_i32 = arith.constant 0 : i32
    %c0_i32_0 = arith.constant 0 : i32
    return %c0_i32, %arg0 : i32, i32
  }
  func.func @transform_2(%arg0: i32) -> (i32, i32) {
    %c0_i32 = arith.constant 0 : i32
    %c0_i32_0 = arith.constant 0 : i32
    %c0_i32_1 = arith.constant 0 : i32
    return %c0_i32, %c0_i32_0 : i32, i32
  }
  func.func @transform_3(%arg0: i32) -> (i32, i32) {
    %c0_i32 = arith.constant 0 : i32
    %c0_i32_0 = arith.constant 0 : i32
    return %c0_i32, %arg0 : i32, i32
  }
}

</mosaic_0001>

<llo_original>
// kernel: focal_loss.1
$region0: #{focal_loss.1}
  #allocation0 [shape = 'u32[]', space=smem, size = 0x4, offset = 0x4, fixed_abs, tag = 'smem constant byte address 0x4 - core index']
  #allocation1 [shape = 'u32[144,128]{1,0:T(1,128)}', space=vmem, size = 0x12000, scoped, tag = 'internal scratch']
  %s0 = inlined_call_operand.hbm [shape: f32[16,256], index: 0, kind: input, shape index: {}]
  %s1 = inlined_call_operand.vmem [shape: s32[1,256], index: 1, kind: input, shape index: {}]
  %s2 = inlined_call_operand.vmem [shape: f32[16,1], index: 2, kind: input, shape index: {}]
  %s3 = inlined_call_operand.vmem [shape: f32[1,256], index: 3, kind: output, shape index: {}]
  %s4 = sld [smem:[#allocation0]]
  $region26: #{focal_loss.1} parent=0
    _
  %s6 = ssub.s32 1, %s4
  %s7 = scalar_select 0, %s6, %s4
  $region1: #{focal_loss.1} parent=0
    #allocation2 [shape = 'u8[16384]{0}', space=vmem, size = 0x4000, scoped, tag = 'input window, operand 0, single buffered']
    #allocation3 [shape = 's32[1]{0}', space=sflag, size = 0x4, scoped, tag = 'scoped memory for focal_loss.1']
    %8 = vsyncpa [#allocation3], 0
    // Predicated region
    $region2: #{focal_loss.1} parent=1 // pred_check
      _
    $region3: #{focal_loss.1} parent=1 // pred_check_branch
      %10 = sbr.rel (0) target = $region5
    $region4: #{focal_loss.1} parent=1 // pred_region
      %s12 = ssub.s32 512, 512
      %13 = vsyncadd [#allocation3], %s12
      %s14 = sshll.u32 [#allocation2], 4
      %s15 = int_to_ptr.vmem [resolvable:$true] %s14
      %20 = dma.hbm_to_vmem [thread:$0]  %s0, 512, %s15, [#allocation3], 256, 256, 16
    $region5: #{focal_loss.1} parent=1 // pred_fallthru
      _
    // Predicated region
    $region6: #{focal_loss.1} parent=1 // pred_check
      _
    $region7: #{focal_loss.1} parent=1 // pred_check_branch
      %22 = sbr.rel (0) target = $region9
    $region8: #{focal_loss.1} parent=1 // pred_region
      _
    $region9: #{focal_loss.1} parent=1 // pred_fallthru
      _
    // Predicated region
    $region10: #{focal_loss.1} parent=1 // pred_check
      _
    $region11: #{focal_loss.1} parent=1 // pred_check_branch
      %24 = sbr.rel (0) target = $region13
    $region12: #{focal_loss.1} parent=1 // pred_region
      _
    $region13: #{focal_loss.1} parent=1 // pred_fallthru
      _
    // Predicated region
    $region14: #{focal_loss.1} parent=1 // pred_check
      _
    $region15: #{focal_loss.1} parent=1 // pred_check_branch
      %26 = sbr.rel (0) target = $region17
    $region16: #{focal_loss.1} parent=1 // pred_region
      %27 = dma.done [#allocation3], 512
    $region17: #{focal_loss.1} parent=1 // pred_fallthru
      _
    %v28 = vld [vmem:[#allocation2] sm:$0xff]
    %v29 = vld [vmem:[#allocation2 + $0x8] sm:$0xff]
    %v30 = vld [vmem:[#allocation2 + $0x10] sm:$0xff]
    %v31 = vld [vmem:[#allocation2 + $0x18] sm:$0xff]
    %v32 = vld [vmem:[%s1] sm:$0x3]
    %v33 = vld [vmem:[%s2] sm:$0xff]
    %v34 = vld [vmem:[%s2 + $0x8] sm:$0xff]
    %v35 = vlaneseq
    %v36 = vshrl.u32 %v35, 7
    %v37 = vadd.s32 %v36, 8
    %v38 = vlaneseq
    %v39 = vshrl.u32 %v38, 7
    %v40 = vsub.s32 0, %v39
    %v41 = vrot.slane %v32, %v40
    %v42 = vlaneseq
    %v43 = vshrl.u32 %v42, 7
    %v44 = vsub.s32 1, %v43
    %v45 = vrot.slane %v32, %v44
    %vm46 = vcmp.eq.s32.totalorder %v36, %v41
    %vm47 = vcmp.eq.s32.totalorder %v36, %v45
    %vm48 = vcmp.eq.s32.totalorder %v37, %v41
    %vm49 = vcmp.eq.s32.totalorder %v37, %v45
    %v50 = vsel %vm46, 1, 0
    %v51 = vsel %vm47, 1, 0
    %v52 = vsel %vm48, 1, 0
    %v53 = vsel %vm49, 1, 0
    %v54 = vcvt.s32.f32 %v50
    %v55 = vcvt.s32.f32 %v51
    %v56 = vcvt.s32.f32 %v52
    %v57 = vcvt.s32.f32 %v53
    %v58 = vmax.f32 %v28, %v30
    %v59 = vrot.slane %v58, 4
    %v60 = vmax.f32 %v58, %v59
    %v61 = vrot.slane %v60, 2
    %v62 = vmax.f32 %v60, %v61
    %v63 = vrot.slane %v62, 1
    %v64 = vmax.f32 %v62, %v63
    %v65 = vmax.f32 %v29, %v31
    %v66 = vrot.slane %v65, 4
    %v67 = vmax.f32 %v65, %v66
    %v68 = vrot.slane %v67, 2
    %v69 = vmax.f32 %v67, %v68
    %v70 = vrot.slane %v69, 1
    %v71 = vmax.f32 %v69, %v70
    %v72 = vsub.f32 %v28, %v64
    %v73 = vsub.f32 %v29, %v71
    %v74 = vsub.f32 %v30, %v64
    %v75 = vsub.f32 %v31, %v71
    %v76 = vmul.f32 %v72, 1.442695
    %v77 = vpow.pop %v76
    %v78 = vmul.f32 %v73, 1.442695
    %v79 = vpow.pop %v78
    %v80 = vmul.f32 %v74, 1.442695
    %v81 = vpow.pop %v80
    %v82 = vmul.f32 %v75, 1.442695
    %v83 = vpow.pop %v82
    %v84 = vadd.f32 %v77, %v81
    %v85 = vrot.slane %v84, 4
    %v86 = vadd.f32 %v84, %v85
    %v87 = vrot.slane %v86, 2
    %v88 = vadd.f32 %v86, %v87
    %v89 = vrot.slane %v88, 1
    %v90 = vadd.f32 %v88, %v89
    %v91 = vadd.f32 %v79, %v83
    %v92 = vrot.slane %v91, 4
    %v93 = vadd.f32 %v91, %v92
    %v94 = vrot.slane %v93, 2
    %v95 = vadd.f32 %v93, %v94
    %v96 = vrot.slane %v95, 1
    %v97 = vadd.f32 %v95, %v96
    %v98 = vmul.f32 %v72, %v54
    %v99 = vmul.f32 %v73, %v55
    %v100 = vmul.f32 %v74, %v56
    %v101 = vmul.f32 %v75, %v57
    %v102 = vadd.f32 %v98, %v100
    %v103 = vrot.slane %v102, 4
    %v104 = vadd.f32 %v102, %v103
    %v105 = vrot.slane %v104, 2
    %v106 = vadd.f32 %v104, %v105
    %v107 = vrot.slane %v106, 1
    %v108 = vadd.f32 %v106, %v107
    %v109 = vadd.f32 %v99, %v101
    %v110 = vrot.slane %v109, 4
    %v111 = vadd.f32 %v109, %v110
    %v112 = vrot.slane %v111, 2
    %v113 = vadd.f32 %v111, %v112
    %v114 = vrot.slane %v113, 1
    %v115 = vadd.f32 %v113, %v114
    %v116 = vlog2.pop %v90
    %v117 = vmul.f32 %v116, 0.6931472
    %v118 = vlog2.pop %v97
    %v119 = vmul.f32 %v118, 0.6931472
    %v120 = vsub.f32 %v108, %v117
    %v121 = vsub.f32 %v115, %v119
    %v122 = vmul.f32 %v120, 1.442695
    %v123 = vpow.pop %v122
    %v124 = vmul.f32 %v121, 1.442695
    %v125 = vpow.pop %v124
    %127 = vset.pattern.permute.xlu0 0
    %128 = vperm.xlu0 %127, %v33
    %v129 = vpop.permute.xlu0 %128
    %132 = vset.pattern.permute.xlu0 0
    %133 = vperm.xlu0 %132, %v34
    %v134 = vpop.permute.xlu0 %133
    %v136 = vmul.f32 %v129, %v54
    %v137 = vmul.f32 %v129, %v55
    %v138 = vmul.f32 %v134, %v56
    %v139 = vmul.f32 %v134, %v57
    %v140 = vadd.f32 %v136, %v138
    %v141 = vrot.slane %v140, 4
    %v142 = vadd.f32 %v140, %v141
    %v143 = vrot.slane %v142, 2
    %v144 = vadd.f32 %v142, %v143
    %v145 = vrot.slane %v144, 1
    %v146 = vadd.f32 %v144, %v145
    %v147 = vadd.f32 %v137, %v139
    %v148 = vrot.slane %v147, 4
    %v149 = vadd.f32 %v147, %v148
    %v150 = vrot.slane %v149, 2
    %v151 = vadd.f32 %v149, %v150
    %v152 = vrot.slane %v151, 1
    %v153 = vadd.f32 %v151, %v152
    %v154 = vsub.f32 1.0, %v123
    %v155 = vsub.f32 1.0, %v125
    %v156 = vmul.f32 %v154, %v154
    %v157 = vmul.f32 %v155, %v155
    %v158 = vsub.f32 0.0, %v146
    %v159 = vsub.f32 0.0, %v153
    %v160 = vmul.f32 %v158, %v156
    %v161 = vmul.f32 %v159, %v157
    %v162 = vmul.f32 %v160, %v120
    %v163 = vmul.f32 %v161, %v121
    %v166 = vcombine.low %v162, %v163
    %v168 = vunpack.c.l.s4 1966171168
    %v169 = vunpack.c.0.s8 %v168
    %v170 = vlaneseq
    %v171 = vshrl.u32 %v170, 7
    %v172 = vsub.s32 %v169, %v171
    %v173 = vrot.slane %v166, %v172
    %v175 = vunpack.c.l.s4 1966171168
    %v176 = vunpack.c.0.s8 %v175
    %v177 = vlaneseq
    %v178 = vshrl.u32 %v177, 7
    %v179 = vsub.s32 %v176, %v178
    %v180 = vrot.slane %v173, %v179
    %v182 = vlaneseq
    %vm183 = vcmp.ge.s32.totalorder %v182, 0
    %vm184 = vcmp.lt.s32.totalorder %v182, 256
    %vm185 = vmand %vm183, %vm184
    %186 = vst.msk [vmem:[%s3] sm:$0x3] %vm185, %v180
    // Predicated region
    $region18: #{focal_loss.1} parent=1 // pred_check
      _
    $region19: #{focal_loss.1} parent=1 // pred_check_branch
      %188 = sbr.rel (0) target = $region21
    $region20: #{focal_loss.1} parent=1 // pred_region
      _
    $region21: #{focal_loss.1} parent=1 // pred_fallthru
      _
    // Predicated region
    $region22: #{focal_loss.1} parent=1 // pred_check
      _
    $region23: #{focal_loss.1} parent=1 // pred_check_branch
      %190 = sbr.rel (0) target = $region25
    $region24: #{focal_loss.1} parent=1 // pred_region
      _
    $region25: #{focal_loss.1} parent=1 // pred_fallthru
      _
    %191 = vsyncpa [#allocation3], 1

</llo_original>
